<compile_context>
chip_gen: v5e
topology: v5e:2x2
jax: 0.10.0
libtpu: 0.0.40
codegen_flags: <defaults>
</compile_context>

<pallas_src>
import jax
import jax.numpy as jnp
from jax.experimental import pallas as pl
from jax.experimental.pallas import tpu as pltpu

H1, H2 = 400, 300        # logical hidden sizes (PyTorch module)
H1P, H2P = 512, 384      # lane-padded hidden sizes (multiples of 128)


def _epilogue_dtype():
    """bf16 bias/ReLU pass on chips with a native-bf16 VPU (v6e/v7x); f32 otherwise."""
    try:
        kind = jax.devices()[0].device_kind.lower()
    except Exception:
        return jnp.float32
    if any(tag in kind for tag in ("v2", "v3", "v4", "v5")):
        return jnp.float32
    return jnp.bfloat16


def critic_kernel(sa_ref, w1_ref, b1_ref, w2_ref, b2_ref, w3_ref, b3_ref, o_ref):
    # fc1: single fused matmul over the packed state||action tile (f32 acc on MXU).
    x16 = sa_ref[...].astype(jnp.bfloat16)
    acc1 = jnp.dot(x16, w1_ref[...], preferred_element_type=jnp.float32)

    # Fused epilogue: bias + ReLU + downcast in one pass, producing fc2's bf16
    # operand directly.  The bias dtype (f32 on v5e, bf16 on v6e/v7x) selects
    # the elementwise width.
    b1 = b1_ref[...]
    h1 = jnp.maximum(acc1.astype(b1.dtype) + b1, 0.0).astype(jnp.bfloat16)

    # fc2
    acc2 = jnp.dot(h1, w2_ref[...], preferred_element_type=jnp.float32)
    b2 = b2_ref[...]
    h2 = jnp.maximum(acc2.astype(b2.dtype) + b2, 0.0)

    # fc3 (output width 1): skip the MXU -- VPU multiply (promotes to f32) +
    # cross-lane reduce; +b3 folded before the (bm,) -> (1, bm) relayout so the
    # relayout feeds the lane-dense store directly.
    q = jnp.sum(h2 * w3_ref[...], axis=-1) + b3_ref[0]        # (bm,), f32
    o_ref[...] = q[None, :].astype(o_ref.dtype)


def init_params(key, state_size, action_size):
    """Deterministic init mimicking PyTorch nn.Linear default U(-1/sqrt(fan_in), +)."""
    def linear(k, fan_in, fan_out):
        kw, kb = jax.random.split(k)
        bound = 1.0 / jnp.sqrt(jnp.float32(fan_in))
        w = jax.random.uniform(kw, (fan_in, fan_out), jnp.float32, -bound, bound)
        b = jax.random.uniform(kb, (1, fan_out), jnp.float32, -bound, bound)
        return w, b

    k1, k2, k3 = jax.random.split(key, 3)
    w1, b1 = linear(k1, state_size + action_size, H1)
    w2, b2 = linear(k2, H1, H2)
    w3, b3 = linear(k3, H2, 1)
    return (w1, b1, w2, b2, w3, b3)


def prepare_params(params, state_size, action_size, epilogue_dtype=None):
    """Fuse fc1, zero-pad hidden dims, bf16 matmul weights, epilogue-dtype biases."""
    if epilogue_dtype is None:
        epilogue_dtype = _epilogue_dtype()
    w1, b1, w2, b2, w3, b3 = params
    SA = state_size + action_size
    w1p = jnp.zeros((SA, H1P), jnp.bfloat16).at[:, :H1].set(w1.astype(jnp.bfloat16))
    b1p = jnp.zeros((1, H1P), epilogue_dtype).at[:, :H1].set(b1.astype(epilogue_dtype))
    w2p = jnp.zeros((H1P, H2P), jnp.bfloat16).at[:H1, :H2].set(w2.astype(jnp.bfloat16))
    b2p = jnp.zeros((1, H2P), epilogue_dtype).at[:, :H2].set(b2.astype(epilogue_dtype))
    w3p = jnp.zeros((1, H2P), jnp.float32).at[0, :H2].set(w3[:, 0])
    b3p = b3.reshape(1).astype(jnp.float32)           # SMEM scalar
    return (w1p, b1p, w2p, b2p, w3p, b3p)


def critic_forward(state, action, kparams, *, block_b=1024):
    """state: [B, state_size], action: [B, action_size] -> q: [B, 1]"""
    w1p, b1p, w2p, b2p, w3p, b3p = kparams
    B, S = state.shape
    A = action.shape[1]
    SA = S + A

    # Pack state||action once upstream (endorsed by perf review): one fused fc1
    # matmul and a single input DMA stream per tile; the O(B*SA) copy is
    # negligible next to the matmuls.
    sa = jnp.concatenate([state, action], axis=1)

    block_b = max(128, (int(block_b) // 128) * 128)
    if B <= 128:
        bm, Bp = B, B                        # single whole-batch tile
    else:
        # >= 2 grid steps so the "parallel" batch axis shards across both
        # TensorCores on v7x; tiles 128-aligned so the (1, bm) output block
        # stays lane-dense / unmasked.
        bm = min(block_b, pl.cdiv(pl.cdiv(B, 2), 128) * 128)
        Bp = pl.cdiv(B, bm) * bm
        if Bp != B:                          # zero-pad batch to a tile multiple
            sa = jnp.pad(sa, ((0, Bp - B), (0, 0)))

    def resident(arr):                       # weights stay VMEM-resident across steps
        return pl.BlockSpec(arr.shape, lambda i: (0, 0))

    out = pl.pallas_call(
        critic_kernel,
        out_shape=jax.ShapeDtypeStruct((1, Bp), jnp.float32),
        grid=(Bp // bm,),
        in_specs=[
            pl.BlockSpec((bm, SA), lambda i: (i, 0)),
            resident(w1p), resident(b1p),
            resident(w2p), resident(b2p),
            resident(w3p),
            pl.BlockSpec(memory_space=pltpu.MemorySpace.SMEM),   # b3 scalar
        ],
        out_specs=pl.BlockSpec((1, bm), lambda i: (0, i)),
        compiler_params=pltpu.CompilerParams(
            dimension_semantics=("parallel",),
            vmem_limit_bytes=32 << 20,
        ),
    )(sa, w1p, b1p, w2p, b2p, w3p, b3p)

    return out[0, :B].reshape(B, 1)


def critic_ref(state, action, params):
    """Pure-JAX f32 reference matching the PyTorch module."""
    w1, b1, w2, b2, w3, b3 = params
    x = jnp.concatenate([state, action], axis=1)
    x = jax.nn.relu(x @ w1 + b1)
    x = jax.nn.relu(x @ w2 + b2)
    return x @ w3 + b3


if __name__ == "__main__":
    key = jax.random.PRNGKey(0)
    k_params, k_state, k_action = jax.random.split(key, 3)

    batch, state_size, action_size = 2, 8, 4
    params = init_params(k_params, state_size, action_size)
    kparams = prepare_params(params, state_size, action_size)

    state = jax.random.normal(k_state, (batch, state_size), jnp.float32)
    action = jax.random.normal(k_action, (batch, action_size), jnp.float32)

    q = critic_forward(state, action, kparams)
    q = jax.block_until_ready(q)

    q_ref = critic_ref(state, action, params)
    assert q.shape == (batch, 1)
    # bf16 matmul weights/activations (+ bf16 epilogue on v6e/v7x) vs. pure-f32
    # reference -> loosened tolerance.
    assert jnp.allclose(q, q_ref, atol=3e-2, rtol=3e-2)

    print("KERNEL_OK")
</pallas_src>

<mosaic_0001>
module attributes {stable_mosaic.version = 11 : i64} {
  func.func @critic_kernel(%arg0: i32, %arg1: memref<2x12xf32, #tpu.memory_space<vmem>>, %arg2: memref<12x512xbf16, #tpu.memory_space<vmem>>, %arg3: memref<1x512xbf16, #tpu.memory_space<vmem>>, %arg4: memref<512x384xbf16, #tpu.memory_space<vmem>>, %arg5: memref<1x384xbf16, #tpu.memory_space<vmem>>, %arg6: memref<1x384xf32, #tpu.memory_space<vmem>>, %arg7: memref<1xf32, #tpu.memory_space<smem>>, %arg8: memref<1x2xf32, #tpu.memory_space<vmem>>) attributes {dimension_semantics = [#tpu.dimension_semantics<parallel>], iteration_bounds = array<i64: 1>, scalar_prefetch = 0 : i64, scratch_operands = 0 : i64, tpu.core_type = #tpu.core_type<tc>, window_params = [{transform_indices = @transform_0, window_bounds = array<i64: 2, 12>}, {pipeline_mode = #tpu.pipeline_mode<synchronous>, transform_indices = @transform_1, window_bounds = array<i64: 12, 512>}, {pipeline_mode = #tpu.pipeline_mode<synchronous>, transform_indices = @transform_2, window_bounds = array<i64: 1, 512>}, {pipeline_mode = #tpu.pipeline_mode<synchronous>, transform_indices = @transform_3, window_bounds = array<i64: 512, 384>}, {pipeline_mode = #tpu.pipeline_mode<synchronous>, transform_indices = @transform_4, window_bounds = array<i64: 1, 384>}, {pipeline_mode = #tpu.pipeline_mode<synchronous>, transform_indices = @transform_5, window_bounds = array<i64: 1, 384>}, {transform_indices = @transform_6, window_bounds = array<i64: 1>}, {transform_indices = @transform_7, window_bounds = array<i64: 1, 2>}]} {
    %c0 = arith.constant 0 : index
    %c0_0 = arith.constant 0 : index
    %0 = vector.load %arg1[%c0, %c0_0] : memref<2x12xf32, #tpu.memory_space<vmem>>, vector<2x12xf32>
    %1 = arith.truncf %0 : vector<2x12xf32> to vector<2x12xbf16>
    %c0_1 = arith.constant 0 : index
    %c0_2 = arith.constant 0 : index
    %2 = vector.load %arg2[%c0_1, %c0_2] : memref<12x512xbf16, #tpu.memory_space<vmem>>, vector<12x512xbf16>
    %cst = arith.constant dense<0.000000e+00> : vector<2x512xf32>
    %3 = tpu.matmul %1, %2, %cst {dimension_numbers = #tpu.dot_dimension_numbers<[1], [0], [0], [1], [0, 0, 1, 1], [], []>} : vector<2x12xbf16>, vector<12x512xbf16>, vector<2x512xf32> -> vector<2x512xf32>
    %c0_3 = arith.constant 0 : index
    %c0_4 = arith.constant 0 : index
    %4 = vector.load %arg3[%c0_3, %c0_4] : memref<1x512xbf16, #tpu.memory_space<vmem>>, vector<1x512xbf16>
    %5 = arith.truncf %3 : vector<2x512xf32> to vector<2x512xbf16>
    %6 = vector.broadcast %4 : vector<1x512xbf16> to vector<2x512xbf16>
    %7 = arith.addf %5, %6 : vector<2x512xbf16>
    %cst_5 = arith.constant 0.000000e+00 : bf16
    %8 = vector.broadcast %cst_5 : bf16 to vector<2x512xbf16>
    %9 = arith.maximumf %7, %8 : vector<2x512xbf16>
    %c0_6 = arith.constant 0 : index
    %c0_7 = arith.constant 0 : index
    %10 = vector.load %arg4[%c0_6, %c0_7] : memref<512x384xbf16, #tpu.memory_space<vmem>>, vector<512x384xbf16>
    %cst_8 = arith.constant dense<0.000000e+00> : vector<2x384xf32>
    %11 = tpu.matmul %9, %10, %cst_8 {dimension_numbers = #tpu.dot_dimension_numbers<[1], [0], [0], [1], [0, 0, 1, 1], [], []>} : vector<2x512xbf16>, vector<512x384xbf16>, vector<2x384xf32> -> vector<2x384xf32>
    %c0_9 = arith.constant 0 : index
    %c0_10 = arith.constant 0 : index
    %12 = vector.load %arg5[%c0_9, %c0_10] : memref<1x384xbf16, #tpu.memory_space<vmem>>, vector<1x384xbf16>
    %13 = arith.truncf %11 : vector<2x384xf32> to vector<2x384xbf16>
    %14 = vector.broadcast %12 : vector<1x384xbf16> to vector<2x384xbf16>
    %15 = arith.addf %13, %14 : vector<2x384xbf16>
    %cst_11 = arith.constant 0.000000e+00 : bf16
    %16 = vector.broadcast %cst_11 : bf16 to vector<2x384xbf16>
    %17 = arith.maximumf %15, %16 : vector<2x384xbf16>
    %c0_12 = arith.constant 0 : index
    %c0_13 = arith.constant 0 : index
    %18 = vector.load %arg6[%c0_12, %c0_13] : memref<1x384xf32, #tpu.memory_space<vmem>>, vector<1x384xf32>
    %19 = arith.extf %17 : vector<2x384xbf16> to vector<2x384xf32>
    %20 = vector.broadcast %18 : vector<1x384xf32> to vector<2x384xf32>
    %21 = arith.mulf %19, %20 : vector<2x384xf32>
    %cst_14 = arith.constant dense<0.000000e+00> : vector<2xf32>
    %22 = vector.multi_reduction <add>, %21, %cst_14 [1] : vector<2x384xf32> to vector<2xf32>
    %c0_15 = arith.constant 0 : index
    %23 = memref.load %arg7[%c0_15] : memref<1xf32, #tpu.memory_space<smem>>
    %24 = vector.broadcast %23 : f32 to vector<2xf32>
    %25 = arith.addf %22, %24 : vector<2xf32>
    %26 = vector.shape_cast %25 : vector<2xf32> to vector<1x2xf32>
    %c0_16 = arith.constant 0 : index
    %c0_17 = arith.constant 0 : index
    %27 = vector.load %arg8[%c0_16, %c0_17] : memref<1x2xf32, #tpu.memory_space<vmem>>, vector<1x2xf32>
    tpu.vector_store %arg8[%c0_16, %c0_17], %26 {strides = array<i32>} : memref<1x2xf32, #tpu.memory_space<vmem>>, vector<1x2xf32>,
    return
  }
  func.func @transform_0(%arg0: i32) -> (i32, i32) {
    %c0_i32 = arith.constant 0 : i32
    %c0_i32_0 = arith.constant 0 : i32
    return %arg0, %c0_i32 : i32, i32
  }
  func.func @transform_1(%arg0: i32) -> (i32, i32) {
    %c0_i32 = arith.constant 0 : i32
    %c0_i32_0 = arith.constant 0 : i32
    %c0_i32_1 = arith.constant 0 : i32
    return %c0_i32, %c0_i32_0 : i32, i32
  }
  func.func @transform_2(%arg0: i32) -> (i32, i32) {
    %c0_i32 = arith.constant 0 : i32
    %c0_i32_0 = arith.constant 0 : i32
    %c0_i32_1 = arith.constant 0 : i32
    return %c0_i32, %c0_i32_0 : i32, i32
  }
  func.func @transform_3(%arg0: i32) -> (i32, i32) {
    %c0_i32 = arith.constant 0 : i32
    %c0_i32_0 = arith.constant 0 : i32
    %c0_i32_1 = arith.constant 0 : i32
    return %c0_i32, %c0_i32_0 : i32, i32
  }
  func.func @transform_4(%arg0: i32) -> (i32, i32) {
    %c0_i32 = arith.constant 0 : i32
    %c0_i32_0 = arith.constant 0 : i32
    %c0_i32_1 = arith.constant 0 : i32
    return %c0_i32, %c0_i32_0 : i32, i32
  }
  func.func @transform_5(%arg0: i32) -> (i32, i32) {
    %c0_i32 = arith.constant 0 : i32
    %c0_i32_0 = arith.constant 0 : i32
    %c0_i32_1 = arith.constant 0 : i32
    return %c0_i32, %c0_i32_0 : i32, i32
  }
  func.func @transform_6(%arg0: i32) -> i32 {
    %c0_i32 = arith.constant 0 : i32
    %c0_i32_0 = arith.constant 0 : i32
    return %c0_i32 : i32
  }
  func.func @transform_7(%arg0: i32) -> (i32, i32) {
    %c0_i32 = arith.constant 0 : i32
    %c0_i32_0 = arith.constant 0 : i32
    return %c0_i32, %arg0 : i32, i32
  }
}

</mosaic_0001>

<llo_original>
// kernel: tpu_custom_call.1
$region0: #{tpu_custom_call.1}
  #allocation0 [shape = 'u32[]', space=smem, size = 0x4, offset = 0x4, fixed_abs, tag = 'smem constant byte address 0x4 - core index']
  #allocation1 [shape = 'u32[72,128]{1,0:T(1,128)}', space=vmem, size = 0x9000, scoped, tag = 'internal scratch']
  #allocation2 [shape = 'f32[1]{0:T(128)S(6)}', space=smem, size = 0x200, scoped, tag = 'scoped memory for tpu_custom_call.1']
  %s0 = inlined_call_operand.hbm [shape: f32[2,12], index: 0, kind: input, shape index: {}]
  %s1 = inlined_call_operand.hbm [shape: bf16[12,512], index: 1, kind: input, shape index: {}]
  %s2 = inlined_call_operand.hbm [shape: bf16[1,512], index: 2, kind: input, shape index: {}]
  %s3 = inlined_call_operand.hbm [shape: bf16[512,384], index: 3, kind: input, shape index: {}]
  %s4 = inlined_call_operand.vmem [shape: bf16[1,384], index: 4, kind: input, shape index: {}]
  %s5 = inlined_call_operand.vmem [shape: f32[1,384], index: 5, kind: input, shape index: {}]
  %s6 = inlined_call_operand.<no memory space> [shape: f32[1], index: 6, kind: input, shape index: {}]
  %s7 = inlined_call_operand.hbm [shape: f32[1,2], index: 7, kind: output, shape index: {}]
  %s8 = sld [smem:[#allocation0]]
  $region54: #{tpu_custom_call.1} parent=0
    _
  %s10 = ssub.s32 1, %s8
  %s11 = scalar_select 0, %s10, %s8
  %12 = sst [smem:[#allocation2]] %s6
  $region1: #{tpu_custom_call.1} parent=0
    #allocation3 [shape = 'u8[1024]{0}', space=vmem, size = 0x400, scoped, tag = 'input window, operand 0, single buffered']
    #allocation4 [shape = 's32[1]{0}', space=sflag, size = 0x4, scoped, tag = 'scoped memory for tpu_custom_call.1']
    #allocation5 [shape = 's32[1]{0}', space=sflag, size = 0x4, scoped, tag = 'scoped memory for tpu_custom_call.1']
    #allocation6 [shape = 'u8[16384]{0}', space=vmem, size = 0x4000, scoped, tag = 'input window, operand 1, single buffered']
    #allocation7 [shape = 's32[1]{0}', space=sflag, size = 0x4, scoped, tag = 'scoped memory for tpu_custom_call.1']
    #allocation8 [shape = 'u8[2048]{0}', space=vmem, size = 0x800, scoped, tag = 'input window, operand 2, single buffered']
    #allocation9 [shape = 'u8[393216]{0}', space=vmem, size = 0x60000, scoped, tag = 'input window, operand 3, single buffered']
    #allocation10 [shape = 's32[1]{0}', space=sflag, size = 0x4, scoped, tag = 'scoped memory for tpu_custom_call.1']
    #allocation11 [shape = 'u8[512]{0}', space=vmem, size = 0x400, scoped, tag = 'output window, operand 0, single buffered']
    %13 = vsyncpa [#allocation4], 0
    %14 = vsyncpa [#allocation7], 0
    %15 = vsyncpa [#allocation10], 0
    %16 = vsyncpa [#allocation5], 0
    // Predicated region
    $region2: #{tpu_custom_call.1} parent=1 // pred_check
      _
    $region3: #{tpu_custom_call.1} parent=1 // pred_check_branch
      %18 = sbr.rel (0) target = $region5
    $region4: #{tpu_custom_call.1} parent=1 // pred_region
      %20 = vsyncadd [#allocation4], 0
      %s22 = sshll.u32 %s0, 4
      %s23 = int_to_ptr.hbm [resolvable:$true] %s22
      %s24 = sshll.u32 [#allocation3], 4
      %s25 = int_to_ptr.vmem [resolvable:$true] %s24
      %27 = dma.hbm_to_vmem [thread:$0]  %s23, 32, %s25, [#allocation4]
    $region5: #{tpu_custom_call.1} parent=1 // pred_fallthru
      _
    // Predicated region
    $region6: #{tpu_custom_call.1} parent=1 // pred_check
      _
    $region7: #{tpu_custom_call.1} parent=1 // pred_check_branch
      %29 = sbr.rel (0) target = $region9
    $region8: #{tpu_custom_call.1} parent=1 // pred_region
      %31 = vsyncadd [#allocation7], 0
      %s32 = sshll.u32 %s1, 4
      %s33 = int_to_ptr.hbm [resolvable:$true] %s32
      %s34 = sshll.u32 [#allocation6], 4
      %s35 = int_to_ptr.vmem [resolvable:$true] %s34
      %40 = dma.hbm_to_vmem [thread:$0]  %s33, 512, %s35, [#allocation7], 256, 256, 16
    $region9: #{tpu_custom_call.1} parent=1 // pred_fallthru
      _
    // Predicated region
    $region10: #{tpu_custom_call.1} parent=1 // pred_check
      _
    $region11: #{tpu_custom_call.1} parent=1 // pred_check_branch
      %42 = sbr.rel (0) target = $region13
    $region12: #{tpu_custom_call.1} parent=1 // pred_region
      %44 = vsyncadd [#allocation7], 0
      %s46 = sshll.u32 %s2, 4
      %s47 = int_to_ptr.hbm [resolvable:$true] %s46
      %s48 = sshll.u32 [#allocation8], 4
      %s49 = int_to_ptr.vmem [resolvable:$true] %s48
      %51 = dma.hbm_to_vmem [thread:$0]  %s47, 64, %s49, [#allocation7]
    $region13: #{tpu_custom_call.1} parent=1 // pred_fallthru
      _
    // Predicated region
    $region14: #{tpu_custom_call.1} parent=1 // pred_check
      _
    $region15: #{tpu_custom_call.1} parent=1 // pred_check_branch
      %53 = sbr.rel (0) target = $region17
    $region16: #{tpu_custom_call.1} parent=1 // pred_region
      %55 = vsyncadd [#allocation10], 0
      %s56 = sshll.u32 %s3, 4
      %s57 = int_to_ptr.hbm [resolvable:$true] %s56
      %s58 = sshll.u32 [#allocation9], 4
      %s59 = int_to_ptr.vmem [resolvable:$true] %s58
      %64 = dma.hbm_to_vmem [thread:$0]  %s57, 12288, %s59, [#allocation10], 192, 192, 12
    $region17: #{tpu_custom_call.1} parent=1 // pred_fallthru
      _
    // Predicated region
    $region18: #{tpu_custom_call.1} parent=1 // pred_check
      _
    $region19: #{tpu_custom_call.1} parent=1 // pred_check_branch
      %66 = sbr.rel (0) target = $region21
    $region20: #{tpu_custom_call.1} parent=1 // pred_region
      _
    $region21: #{tpu_custom_call.1} parent=1 // pred_fallthru
      _
    // Predicated region
    $region22: #{tpu_custom_call.1} parent=1 // pred_check
      _
    $region23: #{tpu_custom_call.1} parent=1 // pred_check_branch
      %68 = sbr.rel (0) target = $region25
    $region24: #{tpu_custom_call.1} parent=1 // pred_region
      _
    $region25: #{tpu_custom_call.1} parent=1 // pred_fallthru
      _
    // Predicated region
    $region26: #{tpu_custom_call.1} parent=1 // pred_check
      _
    $region27: #{tpu_custom_call.1} parent=1 // pred_check_branch
      %70 = sbr.rel (0) target = $region29
    $region28: #{tpu_custom_call.1} parent=1 // pred_region
      _
    $region29: #{tpu_custom_call.1} parent=1 // pred_fallthru
      _
    // Predicated region
    $region30: #{tpu_custom_call.1} parent=1 // pred_check
      _
    $region31: #{tpu_custom_call.1} parent=1 // pred_check_branch
      %72 = sbr.rel (0) target = $region33
    $region32: #{tpu_custom_call.1} parent=1 // pred_region
      %74 = dma.done [#allocation4], 32
    $region33: #{tpu_custom_call.1} parent=1 // pred_fallthru
      _
    // Predicated region
    $region34: #{tpu_custom_call.1} parent=1 // pred_check
      _
    $region35: #{tpu_custom_call.1} parent=1 // pred_check_branch
      %76 = sbr.rel (0) target = $region37
    $region36: #{tpu_custom_call.1} parent=1 // pred_region
      %78 = dma.done [#allocation7], 512
    $region37: #{tpu_custom_call.1} parent=1 // pred_fallthru
      _
    // Predicated region
    $region38: #{tpu_custom_call.1} parent=1 // pred_check
      _
    $region39: #{tpu_custom_call.1} parent=1 // pred_check_branch
      %80 = sbr.rel (0) target = $region41
    $region40: #{tpu_custom_call.1} parent=1 // pred_region
      %82 = dma.done [#allocation7], 64
    $region41: #{tpu_custom_call.1} parent=1 // pred_fallthru
      _
    // Predicated region
    $region42: #{tpu_custom_call.1} parent=1 // pred_check
      _
    $region43: #{tpu_custom_call.1} parent=1 // pred_check_branch
      %84 = sbr.rel (0) target = $region45
    $region44: #{tpu_custom_call.1} parent=1 // pred_region
      %86 = dma.done [#allocation10], 12288
    $region45: #{tpu_custom_call.1} parent=1 // pred_fallthru
      _
    %v88 = vld [vmem:[#allocation3] sm:$0x3]
    %v89 = vpack.c.bf16 %v88, %v88
    %v90 = vld [vmem:[#allocation6] sm:$0xff]
    %v91 = vld [vmem:[#allocation6 + $0x8] sm:$0xff]
    %v92 = vld [vmem:[#allocation6 + $0x10] sm:$0x33]
    %v93 = vld [vmem:[#allocation6 + $0x18] sm:$0x33]
    %v98 = vunpack.c.l.b16 %v90
    %v99 = vunpack.c.h.b16 %v90
    %v100 = vunpack.c.l.b16 %v91
    %v101 = vunpack.c.h.b16 %v91
    %v102 = vunpack.c.l.b16 %v92
    %v103 = vunpack.c.h.b16 %v92
    %v104 = vunpack.c.l.b16 %v93
    %v105 = vunpack.c.h.b16 %v93
    %v106 = vpack.c.b16 %v102, %v98
    %v107 = vpack.c.b16 %v103, %v99
    %v108 = vpack.c.b16 %v104, %v100
    %v109 = vpack.c.b16 %v105, %v101
    %vm110 = vcmask 97280
    %v112 = vsel %vm110, %v89, 0
    %vm114 = vcmask 1045504
    %v116 = vsel %vm114, %v106, 0
    %v119 = vsel %vm114, %v107, 0
    %v122 = vsel %vm114, %v108, 0
    %v125 = vsel %vm114, %v109, 0
    %127 = vmatpush.bf16.msra.mxu0 0
    %128 = vmatpush.bf16.msra.mxu0 0
    %129 = vmatpush.bf16.msra.mxu0 0
    %130 = vmatpush.bf16.msra.mxu0 0
    %131 = vmatpush.bf16.msra.mxu0 0
    %132 = vmatpush.bf16.msra.mxu0 0
    %133 = vmatpush.bf16.msra.mxu0 0
    %134 = vmatpush.bf16.msra.mxu0 %v116
    %135 = vmatmul.bf16.gmra.mxu0 %v112
    %v136 = vpop.f32.mrf.mxu0
    %v137 = vadd.f32 0.0, %v136
    %v138 = vpop.f32.mrf.mxu0
    %139 = vdwg.mxu0
    %140 = vmatpush.bf16.msra.mxu0 0
    %141 = vmatpush.bf16.msra.mxu0 0
    %142 = vmatpush.bf16.msra.mxu0 0
    %143 = vmatpush.bf16.msra.mxu0 0
    %144 = vmatpush.bf16.msra.mxu0 0
    %145 = vmatpush.bf16.msra.mxu0 0
    %146 = vmatpush.bf16.msra.mxu0 0
    %147 = vmatpush.bf16.msra.mxu0 %v119
    %148 = vmatmul.bf16.gmra.mxu0 %v112
    %v149 = vpop.f32.mrf.mxu0
    %v150 = vadd.f32 0.0, %v149
    %v151 = vpop.f32.mrf.mxu0
    %152 = vdwg.mxu0
    %153 = vmatpush.bf16.msra.mxu0 0
    %154 = vmatpush.bf16.msra.mxu0 0
    %155 = vmatpush.bf16.msra.mxu0 0
    %156 = vmatpush.bf16.msra.mxu0 0
    %157 = vmatpush.bf16.msra.mxu0 0
    %158 = vmatpush.bf16.msra.mxu0 0
    %159 = vmatpush.bf16.msra.mxu0 0
    %160 = vmatpush.bf16.msra.mxu0 %v122
    %161 = vmatmul.bf16.gmra.mxu0 %v112
    %v162 = vpop.f32.mrf.mxu0
    %v163 = vadd.f32 0.0, %v162
    %v164 = vpop.f32.mrf.mxu0
    %165 = vdwg.mxu0
    %166 = vmatpush.bf16.msra.mxu0 0
    %167 = vmatpush.bf16.msra.mxu0 0
    %168 = vmatpush.bf16.msra.mxu0 0
    %169 = vmatpush.bf16.msra.mxu0 0
    %170 = vmatpush.bf16.msra.mxu0 0
    %171 = vmatpush.bf16.msra.mxu0 0
    %172 = vmatpush.bf16.msra.mxu0 0
    %173 = vmatpush.bf16.msra.mxu0 %v125
    %174 = vmatmul.bf16.gmra.mxu0 %v112
    %v175 = vpop.f32.mrf.mxu0
    %v176 = vadd.f32 0.0, %v175
    %v177 = vpop.f32.mrf.mxu0
    %178 = vdwg.mxu0
    %v179 = vld [vmem:[#allocation8] sm:$0xf]
    %v180 = vpack.c.bf16 %v150, %v137
    %v181 = vpack.c.bf16 %v176, %v163
    %183 = vst [vmem:[#allocation1] ss:$9 sm:$0xff] %v179
    %v184 = vld [vmem:[#allocation1] sm:$0xff]
    %v185 = vld [vmem:[#allocation1 + $0x9] sm:$0xff]
    %v186 = vld [vmem:[#allocation1 + $0x12] sm:$0xff]
    %v187 = vld [vmem:[#allocation1 + $0x1b] sm:$0xff]
    %v188 = vpack.i.b16 %v184, %v184
    %v190 = vperm.slane %v188, 0
    %v191 = vpack.i.b16 %v185, %v185
    %v193 = vperm.slane %v191, 0
    %v194 = vpack.i.b16 %v186, %v186
    %v196 = vperm.slane %v194, 0
    %v197 = vpack.i.b16 %v187, %v187
    %v199 = vperm.slane %v197, 0
    %v200 = vunpack.c.l.bf16 %v180
    %v201 = vunpack.c.h.bf16 %v180
    %v202 = vunpack.c.l.bf16 %v181
    %v203 = vunpack.c.h.bf16 %v181
    %v204 = vunpack.c.l.bf16 %v190
    %v205 = vunpack.c.l.bf16 %v193
    %v206 = vunpack.c.l.bf16 %v196
    %v207 = vunpack.c.l.bf16 %v199
    %v208 = vadd.f32 %v200, %v204
    %v209 = vadd.f32 %v201, %v205
    %v210 = vadd.f32 %v202, %v206
    %v211 = vadd.f32 %v203, %v207
    %v212 = vpack.c.bf16 %v209, %v208
    %v213 = vpack.c.bf16 %v211, %v210
    %v214 = vunpack.c.l.bf16 %v212
    %v215 = vunpack.c.h.bf16 %v212
    %v216 = vunpack.c.l.bf16 %v213
    %v217 = vunpack.c.h.bf16 %v213
    %v218 = vmax.f32 %v214, 0.0
    %v219 = vmax.f32 %v215, 0.0
    %v220 = vmax.f32 %v216, 0.0
    %v221 = vmax.f32 %v217, 0.0
    %v222 = vpack.c.bf16 %v218, %v218
    %v223 = vpack.c.bf16 %v219, %v219
    %v224 = vpack.c.bf16 %v220, %v220
    %v225 = vpack.c.bf16 %v221, %v221
    %v226 = vld [vmem:[#allocation9] sm:$0xff]
    %v227 = vld [vmem:[#allocation9 + $0x8] sm:$0xf]
    %v228 = vld [vmem:[#allocation9 + $0xc] sm:$0xff]
    %v229 = vld [vmem:[#allocation9 + $0x14] sm:$0xf]
    %v230 = vld [vmem:[#allocation9 + $0x18] sm:$0xff]
    %v231 = vld [vmem:[#allocation9 + $0x20] sm:$0xf]
    %v232 = vld [vmem:[#allocation9 + $0x24] sm:$0xff]
    %v233 = vld [vmem:[#allocation9 + $0x2c] sm:$0xf]
    %v234 = vld [vmem:[#allocation9 + $0x30] sm:$0xff]
    %v235 = vld [vmem:[#allocation9 + $0x38] sm:$0xf]
    %v236 = vld [vmem:[#allocation9 + $0x3c] sm:$0xff]
    %v237 = vld [vmem:[#allocation9 + $0x44] sm:$0xf]
    %v238 = vld [vmem:[#allocation9 + $0x48] sm:$0xff]
    %v239 = vld [vmem:[#allocation9 + $0x50] sm:$0xf]
    %v240 = vld [vmem:[#allocation9 + $0x54] sm:$0xff]
    %v241 = vld [vmem:[#allocation9 + $0x5c] sm:$0xf]
    %v242 = vld [vmem:[#allocation9 + $0x60] sm:$0xff]
    %v243 = vld [vmem:[#allocation9 + $0x68] sm:$0xf]
    %v244 = vld [vmem:[#allocation9 + $0x6c] sm:$0xff]
    %v245 = vld [vmem:[#allocation9 + $0x74] sm:$0xf]
    %v246 = vld [vmem:[#allocation9 + $0x78] sm:$0xff]
    %v247 = vld [vmem:[#allocation9 + $0x80] sm:$0xf]
    %v248 = vld [vmem:[#allocation9 + $0x84] sm:$0xff]
    %v249 = vld [vmem:[#allocation9 + $0x8c] sm:$0xf]
    %v250 = vld [vmem:[#allocation9 + $0x90] sm:$0xff]
    %v251 = vld [vmem:[#allocation9 + $0x98] sm:$0xf]
    %v252 = vld [vmem:[#allocation9 + $0x9c] sm:$0xff]
    %v253 = vld [vmem:[#allocation9 + $0xa4] sm:$0xf]
    %v254 = vld [vmem:[#allocation9 + $0xa8] sm:$0xff]
    %v255 = vld [vmem:[#allocation9 + $0xb0] sm:$0xf]
    %v256 = vld [vmem:[#allocation9 + $0xb4] sm:$0xff]
    %v257 = vld [vmem:[#allocation9 + $0xbc] sm:$0xf]
    %v258 = vld [vmem:[#allocation9 + $0xc0] sm:$0xff]
    %v259 = vld [vmem:[#allocation9 + $0xc8] sm:$0xf]
    %v260 = vld [vmem:[#allocation9 + $0xcc] sm:$0xff]
    %v261 = vld [vmem:[#allocation9 + $0xd4] sm:$0xf]
    %v262 = vld [vmem:[#allocation9 + $0xd8] sm:$0xff]
    %v263 = vld [vmem:[#allocation9 + $0xe0] sm:$0xf]
    %v264 = vld [vmem:[#allocation9 + $0xe4] sm:$0xff]
    %v265 = vld [vmem:[#allocation9 + $0xec] sm:$0xf]
    %v266 = vld [vmem:[#allocation9 + $0xf0] sm:$0xff]
    %v267 = vld [vmem:[#allocation9 + $0xf8] sm:$0xf]
    %v268 = vld [vmem:[#allocation9 + $0xfc] sm:$0xff]
    %v269 = vld [vmem:[#allocation9 + $0x104] sm:$0xf]
    %v270 = vld [vmem:[#allocation9 + $0x108] sm:$0xff]
    %v271 = vld [vmem:[#allocation9 + $0x110] sm:$0xf]
    %v272 = vld [vmem:[#allocation9 + $0x114] sm:$0xff]
    %v273 = vld [vmem:[#allocation9 + $0x11c] sm:$0xf]
    %v274 = vld [vmem:[#allocation9 + $0x120] sm:$0xff]
    %v275 = vld [vmem:[#allocation9 + $0x128] sm:$0xf]
    %v276 = vld [vmem:[#allocation9 + $0x12c] sm:$0xff]
    %v277 = vld [vmem:[#allocation9 + $0x134] sm:$0xf]
    %v278 = vld [vmem:[#allocation9 + $0x138] sm:$0xff]
    %v279 = vld [vmem:[#allocation9 + $0x140] sm:$0xf]
    %v280 = vld [vmem:[#allocation9 + $0x144] sm:$0xff]
    %v281 = vld [vmem:[#allocation9 + $0x14c] sm:$0xf]
    %v282 = vld [vmem:[#allocation9 + $0x150] sm:$0xff]
    %v283 = vld [vmem:[#allocation9 + $0x158] sm:$0xf]
    %v284 = vld [vmem:[#allocation9 + $0x15c] sm:$0xff]
    %v285 = vld [vmem:[#allocation9 + $0x164] sm:$0xf]
    %v286 = vld [vmem:[#allocation9 + $0x168] sm:$0xff]
    %v287 = vld [vmem:[#allocation9 + $0x170] sm:$0xf]
    %v288 = vld [vmem:[#allocation9 + $0x174] sm:$0xff]
    %v289 = vld [vmem:[#allocation9 + $0x17c] sm:$0xf]
    %v290 = vld [vmem:[#allocation9 + $0x180] sm:$0xff]
    %v291 = vld [vmem:[#allocation9 + $0x188] sm:$0xf]
    %v292 = vld [vmem:[#allocation9 + $0x18c] sm:$0xff]
    %v293 = vld [vmem:[#allocation9 + $0x194] sm:$0xf]
    %v294 = vld [vmem:[#allocation9 + $0x198] sm:$0xff]
    %v295 = vld [vmem:[#allocation9 + $0x1a0] sm:$0xf]
    %v296 = vld [vmem:[#allocation9 + $0x1a4] sm:$0xff]
    %v297 = vld [vmem:[#allocation9 + $0x1ac] sm:$0xf]
    %v298 = vld [vmem:[#allocation9 + $0x1b0] sm:$0xff]
    %v299 = vld [vmem:[#allocation9 + $0x1b8] sm:$0xf]
    %v300 = vld [vmem:[#allocation9 + $0x1bc] sm:$0xff]
    %v301 = vld [vmem:[#allocation9 + $0x1c4] sm:$0xf]
    %v302 = vld [vmem:[#allocation9 + $0x1c8] sm:$0xff]
    %v303 = vld [vmem:[#allocation9 + $0x1d0] sm:$0xf]
    %v304 = vld [vmem:[#allocation9 + $0x1d4] sm:$0xff]
    %v305 = vld [vmem:[#allocation9 + $0x1dc] sm:$0xf]
    %v306 = vld [vmem:[#allocation9 + $0x1e0] sm:$0xff]
    %v307 = vld [vmem:[#allocation9 + $0x1e8] sm:$0xf]
    %v308 = vld [vmem:[#allocation9 + $0x1ec] sm:$0xff]
    %v309 = vld [vmem:[#allocation9 + $0x1f4] sm:$0xf]
    %v310 = vld [vmem:[#allocation9 + $0x1f8] sm:$0xff]
    %v311 = vld [vmem:[#allocation9 + $0x200] sm:$0xf]
    %v312 = vld [vmem:[#allocation9 + $0x204] sm:$0xff]
    %v313 = vld [vmem:[#allocation9 + $0x20c] sm:$0xf]
    %v314 = vld [vmem:[#allocation9 + $0x210] sm:$0xff]
    %v315 = vld [vmem:[#allocation9 + $0x218] sm:$0xf]
    %v316 = vld [vmem:[#allocation9 + $0x21c] sm:$0xff]
    %v317 = vld [vmem:[#allocation9 + $0x224] sm:$0xf]
    %v318 = vld [vmem:[#allocation9 + $0x228] sm:$0xff]
    %v319 = vld [vmem:[#allocation9 + $0x230] sm:$0xf]
    %v320 = vld [vmem:[#allocation9 + $0x234] sm:$0xff]
    %v321 = vld [vmem:[#allocation9 + $0x23c] sm:$0xf]
    %v322 = vld [vmem:[#allocation9 + $0x240] sm:$0xff]
    %v323 = vld [vmem:[#allocation9 + $0x248] sm:$0xf]
    %v324 = vld [vmem:[#allocation9 + $0x24c] sm:$0xff]
    %v325 = vld [vmem:[#allocation9 + $0x254] sm:$0xf]
    %v326 = vld [vmem:[#allocation9 + $0x258] sm:$0xff]
    %v327 = vld [vmem:[#allocation9 + $0x260] sm:$0xf]
    %v328 = vld [vmem:[#allocation9 + $0x264] sm:$0xff]
    %v329 = vld [vmem:[#allocation9 + $0x26c] sm:$0xf]
    %v330 = vld [vmem:[#allocation9 + $0x270] sm:$0xff]
    %v331 = vld [vmem:[#allocation9 + $0x278] sm:$0xf]
    %v332 = vld [vmem:[#allocation9 + $0x27c] sm:$0xff]
    %v333 = vld [vmem:[#allocation9 + $0x284] sm:$0xf]
    %v334 = vld [vmem:[#allocation9 + $0x288] sm:$0xff]
    %v335 = vld [vmem:[#allocation9 + $0x290] sm:$0xf]
    %v336 = vld [vmem:[#allocation9 + $0x294] sm:$0xff]
    %v337 = vld [vmem:[#allocation9 + $0x29c] sm:$0xf]
    %v338 = vld [vmem:[#allocation9 + $0x2a0] sm:$0xff]
    %v339 = vld [vmem:[#allocation9 + $0x2a8] sm:$0xf]
    %v340 = vld [vmem:[#allocation9 + $0x2ac] sm:$0xff]
    %v341 = vld [vmem:[#allocation9 + $0x2b4] sm:$0xf]
    %v342 = vld [vmem:[#allocation9 + $0x2b8] sm:$0xff]
    %v343 = vld [vmem:[#allocation9 + $0x2c0] sm:$0xf]
    %v344 = vld [vmem:[#allocation9 + $0x2c4] sm:$0xff]
    %v345 = vld [vmem:[#allocation9 + $0x2cc] sm:$0xf]
    %v346 = vld [vmem:[#allocation9 + $0x2d0] sm:$0xff]
    %v347 = vld [vmem:[#allocation9 + $0x2d8] sm:$0xf]
    %v348 = vld [vmem:[#allocation9 + $0x2dc] sm:$0xff]
    %v349 = vld [vmem:[#allocation9 + $0x2e4] sm:$0xf]
    %v350 = vld [vmem:[#allocation9 + $0x2e8] sm:$0xff]
    %v351 = vld [vmem:[#allocation9 + $0x2f0] sm:$0xf]
    %v352 = vld [vmem:[#allocation9 + $0x2f4] sm:$0xff]
    %v353 = vld [vmem:[#allocation9 + $0x2fc] sm:$0xf]
    %v482 = vunpack.c.l.b16 %v226
    %v483 = vunpack.c.h.b16 %v226
    %v484 = vunpack.c.l.b16 %v227
    %v485 = vunpack.c.l.b16 %v228
    %v486 = vunpack.c.h.b16 %v228
    %v487 = vunpack.c.l.b16 %v229
    %v488 = vunpack.c.l.b16 %v230
    %v489 = vunpack.c.h.b16 %v230
    %v490 = vunpack.c.l.b16 %v231
    %v491 = vunpack.c.l.b16 %v232
    %v492 = vunpack.c.h.b16 %v232
    %v493 = vunpack.c.l.b16 %v233
    %v494 = vunpack.c.l.b16 %v234
    %v495 = vunpack.c.h.b16 %v234
    %v496 = vunpack.c.l.b16 %v235
    %v497 = vunpack.c.l.b16 %v236
    %v498 = vunpack.c.h.b16 %v236
    %v499 = vunpack.c.l.b16 %v237
    %v500 = vunpack.c.l.b16 %v238
    %v501 = vunpack.c.h.b16 %v238
    %v502 = vunpack.c.l.b16 %v239
    %v503 = vunpack.c.l.b16 %v240
    %v504 = vunpack.c.h.b16 %v240
    %v505 = vunpack.c.l.b16 %v241
    %v506 = vunpack.c.l.b16 %v242
    %v507 = vunpack.c.h.b16 %v242
    %v508 = vunpack.c.l.b16 %v243
    %v509 = vunpack.c.l.b16 %v244
    %v510 = vunpack.c.h.b16 %v244
    %v511 = vunpack.c.l.b16 %v245
    %v512 = vunpack.c.l.b16 %v246
    %v513 = vunpack.c.h.b16 %v246
    %v514 = vunpack.c.l.b16 %v247
    %v515 = vunpack.c.l.b16 %v248
    %v516 = vunpack.c.h.b16 %v248
    %v517 = vunpack.c.l.b16 %v249
    %v518 = vunpack.c.l.b16 %v250
    %v519 = vunpack.c.h.b16 %v250
    %v520 = vunpack.c.l.b16 %v251
    %v521 = vunpack.c.l.b16 %v252
    %v522 = vunpack.c.h.b16 %v252
    %v523 = vunpack.c.l.b16 %v253
    %v524 = vunpack.c.l.b16 %v254
    %v525 = vunpack.c.h.b16 %v254
    %v526 = vunpack.c.l.b16 %v255
    %v527 = vunpack.c.l.b16 %v256
    %v528 = vunpack.c.h.b16 %v256
    %v529 = vunpack.c.l.b16 %v257
    %v530 = vunpack.c.l.b16 %v258
    %v531 = vunpack.c.h.b16 %v258
    %v532 = vunpack.c.l.b16 %v259
    %v533 = vunpack.c.l.b16 %v260
    %v534 = vunpack.c.h.b16 %v260
    %v535 = vunpack.c.l.b16 %v261
    %v536 = vunpack.c.l.b16 %v262
    %v537 = vunpack.c.h.b16 %v262
    %v538 = vunpack.c.l.b16 %v263
    %v539 = vunpack.c.l.b16 %v264
    %v540 = vunpack.c.h.b16 %v264
    %v541 = vunpack.c.l.b16 %v265
    %v542 = vunpack.c.l.b16 %v266
    %v543 = vunpack.c.h.b16 %v266
    %v544 = vunpack.c.l.b16 %v267
    %v545 = vunpack.c.l.b16 %v268
    %v546 = vunpack.c.h.b16 %v268
    %v547 = vunpack.c.l.b16 %v269
    %v548 = vunpack.c.l.b16 %v270
    %v549 = vunpack.c.h.b16 %v270
    %v550 = vunpack.c.l.b16 %v271
    %v551 = vunpack.c.l.b16 %v272
    %v552 = vunpack.c.h.b16 %v272
    %v553 = vunpack.c.l.b16 %v273
    %v554 = vunpack.c.l.b16 %v274
    %v555 = vunpack.c.h.b16 %v274
    %v556 = vunpack.c.l.b16 %v275
    %v557 = vunpack.c.l.b16 %v276
    %v558 = vunpack.c.h.b16 %v276
    %v559 = vunpack.c.l.b16 %v277
    %v560 = vunpack.c.l.b16 %v278
    %v561 = vunpack.c.h.b16 %v278
    %v562 = vunpack.c.l.b16 %v279
    %v563 = vunpack.c.l.b16 %v280
    %v564 = vunpack.c.h.b16 %v280
    %v565 = vunpack.c.l.b16 %v281
    %v566 = vunpack.c.l.b16 %v282
    %v567 = vunpack.c.h.b16 %v282
    %v568 = vunpack.c.l.b16 %v283
    %v569 = vunpack.c.l.b16 %v284
    %v570 = vunpack.c.h.b16 %v284
    %v571 = vunpack.c.l.b16 %v285
    %v572 = vunpack.c.l.b16 %v286
    %v573 = vunpack.c.h.b16 %v286
    %v574 = vunpack.c.l.b16 %v287
    %v575 = vunpack.c.l.b16 %v288
    %v576 = vunpack.c.h.b16 %v288
    %v577 = vunpack.c.l.b16 %v289
    %v578 = vunpack.c.l.b16 %v290
    %v579 = vunpack.c.h.b16 %v290
    %v580 = vunpack.c.l.b16 %v291
    %v581 = vunpack.c.l.b16 %v292
    %v582 = vunpack.c.h.b16 %v292
    %v583 = vunpack.c.l.b16 %v293
    %v584 = vunpack.c.l.b16 %v294
    %v585 = vunpack.c.h.b16 %v294
    %v586 = vunpack.c.l.b16 %v295
    %v587 = vunpack.c.l.b16 %v296
    %v588 = vunpack.c.h.b16 %v296
    %v589 = vunpack.c.l.b16 %v297
    %v590 = vunpack.c.l.b16 %v298
    %v591 = vunpack.c.h.b16 %v298
    %v592 = vunpack.c.l.b16 %v299
    %v593 = vunpack.c.l.b16 %v300
    %v594 = vunpack.c.h.b16 %v300
    %v595 = vunpack.c.l.b16 %v301
    %v596 = vunpack.c.l.b16 %v302
    %v597 = vunpack.c.h.b16 %v302
    %v598 = vunpack.c.l.b16 %v303
    %v599 = vunpack.c.l.b16 %v304
    %v600 = vunpack.c.h.b16 %v304
    %v601 = vunpack.c.l.b16 %v305
    %v602 = vunpack.c.l.b16 %v306
    %v603 = vunpack.c.h.b16 %v306
    %v604 = vunpack.c.l.b16 %v307
    %v605 = vunpack.c.l.b16 %v308
    %v606 = vunpack.c.h.b16 %v308
    %v607 = vunpack.c.l.b16 %v309
    %v608 = vunpack.c.l.b16 %v310
    %v609 = vunpack.c.h.b16 %v310
    %v610 = vunpack.c.l.b16 %v311
    %v611 = vunpack.c.l.b16 %v312
    %v612 = vunpack.c.h.b16 %v312
    %v613 = vunpack.c.l.b16 %v313
    %v614 = vunpack.c.l.b16 %v314
    %v615 = vunpack.c.h.b16 %v314
    %v616 = vunpack.c.l.b16 %v315
    %v617 = vunpack.c.l.b16 %v316
    %v618 = vunpack.c.h.b16 %v316
    %v619 = vunpack.c.l.b16 %v317
    %v620 = vunpack.c.l.b16 %v318
    %v621 = vunpack.c.h.b16 %v318
    %v622 = vunpack.c.l.b16 %v319
    %v623 = vunpack.c.l.b16 %v320
    %v624 = vunpack.c.h.b16 %v320
    %v625 = vunpack.c.l.b16 %v321
    %v626 = vunpack.c.l.b16 %v322
    %v627 = vunpack.c.h.b16 %v322
    %v628 = vunpack.c.l.b16 %v323
    %v629 = vunpack.c.l.b16 %v324
    %v630 = vunpack.c.h.b16 %v324
    %v631 = vunpack.c.l.b16 %v325
    %v632 = vunpack.c.l.b16 %v326
    %v633 = vunpack.c.h.b16 %v326
    %v634 = vunpack.c.l.b16 %v327
    %v635 = vunpack.c.l.b16 %v328
    %v636 = vunpack.c.h.b16 %v328
    %v637 = vunpack.c.l.b16 %v329
    %v638 = vunpack.c.l.b16 %v330
    %v639 = vunpack.c.h.b16 %v330
    %v640 = vunpack.c.l.b16 %v331
    %v641 = vunpack.c.l.b16 %v332
    %v642 = vunpack.c.h.b16 %v332
    %v643 = vunpack.c.l.b16 %v333
    %v644 = vunpack.c.l.b16 %v334
    %v645 = vunpack.c.h.b16 %v334
    %v646 = vunpack.c.l.b16 %v335
    %v647 = vunpack.c.l.b16 %v336
    %v648 = vunpack.c.h.b16 %v336
    %v649 = vunpack.c.l.b16 %v337
    %v650 = vunpack.c.l.b16 %v338
    %v651 = vunpack.c.h.b16 %v338
    %v652 = vunpack.c.l.b16 %v339
    %v653 = vunpack.c.l.b16 %v340
    %v654 = vunpack.c.h.b16 %v340
    %v655 = vunpack.c.l.b16 %v341
    %v656 = vunpack.c.l.b16 %v342
    %v657 = vunpack.c.h.b16 %v342
    %v658 = vunpack.c.l.b16 %v343
    %v659 = vunpack.c.l.b16 %v344
    %v660 = vunpack.c.h.b16 %v344
    %v661 = vunpack.c.l.b16 %v345
    %v662 = vunpack.c.l.b16 %v346
    %v663 = vunpack.c.h.b16 %v346
    %v664 = vunpack.c.l.b16 %v347
    %v665 = vunpack.c.l.b16 %v348
    %v666 = vunpack.c.h.b16 %v348
    %v667 = vunpack.c.l.b16 %v349
    %v668 = vunpack.c.l.b16 %v350
    %v669 = vunpack.c.h.b16 %v350
    %v670 = vunpack.c.l.b16 %v351
    %v671 = vunpack.c.l.b16 %v352
    %v672 = vunpack.c.h.b16 %v352
    %v673 = vunpack.c.l.b16 %v353
    %v674 = vpack.c.b16 %v485, %v482
    %v675 = vpack.c.b16 %v486, %v483
    %v676 = vpack.c.b16 %v487, %v484
    %v677 = vpack.c.b16 %v491, %v488
    %v678 = vpack.c.b16 %v492, %v489
    %v679 = vpack.c.b16 %v493, %v490
    %v680 = vpack.c.b16 %v497, %v494
    %v681 = vpack.c.b16 %v498, %v495
    %v682 = vpack.c.b16 %v499, %v496
    %v683 = vpack.c.b16 %v503, %v500
    %v684 = vpack.c.b16 %v504, %v501
    %v685 = vpack.c.b16 %v505, %v502
    %v686 = vpack.c.b16 %v509, %v506
    %v687 = vpack.c.b16 %v510, %v507
    %v688 = vpack.c.b16 %v511, %v508
    %v689 = vpack.c.b16 %v515, %v512
    %v690 = vpack.c.b16 %v516, %v513
    %v691 = vpack.c.b16 %v517, %v514
    %v692 = vpack.c.b16 %v521, %v518
    %v693 = vpack.c.b16 %v522, %v519
    %v694 = vpack.c.b16 %v523, %v520
    %v695 = vpack.c.b16 %v527, %v524
    %v696 = vpack.c.b16 %v528, %v525
    %v697 = vpack.c.b16 %v529, %v526
    %v698 = vpack.c.b16 %v533, %v530
    %v699 = vpack.c.b16 %v534, %v531
    %v700 = vpack.c.b16 %v535, %v532
    %v701 = vpack.c.b16 %v539, %v536
    %v702 = vpack.c.b16 %v540, %v537
    %v703 = vpack.c.b16 %v541, %v538
    %v704 = vpack.c.b16 %v545, %v542
    %v705 = vpack.c.b16 %v546, %v543
    %v706 = vpack.c.b16 %v547, %v544
    %v707 = vpack.c.b16 %v551, %v548
    %v708 = vpack.c.b16 %v552, %v549
    %v709 = vpack.c.b16 %v553, %v550
    %v710 = vpack.c.b16 %v557, %v554
    %v711 = vpack.c.b16 %v558, %v555
    %v712 = vpack.c.b16 %v559, %v556
    %v713 = vpack.c.b16 %v563, %v560
    %v714 = vpack.c.b16 %v564, %v561
    %v715 = vpack.c.b16 %v565, %v562
    %v716 = vpack.c.b16 %v569, %v566
    %v717 = vpack.c.b16 %v570, %v567
    %v718 = vpack.c.b16 %v571, %v568
    %v719 = vpack.c.b16 %v575, %v572
    %v720 = vpack.c.b16 %v576, %v573
    %v721 = vpack.c.b16 %v577, %v574
    %v722 = vpack.c.b16 %v581, %v578
    %v723 = vpack.c.b16 %v582, %v579
    %v724 = vpack.c.b16 %v583, %v580
    %v725 = vpack.c.b16 %v587, %v584
    %v726 = vpack.c.b16 %v588, %v585
    %v727 = vpack.c.b16 %v589, %v586
    %v728 = vpack.c.b16 %v593, %v590
    %v729 = vpack.c.b16 %v594, %v591
    %v730 = vpack.c.b16 %v595, %v592
    %v731 = vpack.c.b16 %v599, %v596
    %v732 = vpack.c.b16 %v600, %v597
    %v733 = vpack.c.b16 %v601, %v598
    %v734 = vpack.c.b16 %v605, %v602
    %v735 = vpack.c.b16 %v606, %v603
    %v736 = vpack.c.b16 %v607, %v604
    %v737 = vpack.c.b16 %v611, %v608
    %v738 = vpack.c.b16 %v612, %v609
    %v739 = vpack.c.b16 %v613, %v610
    %v740 = vpack.c.b16 %v617, %v614
    %v741 = vpack.c.b16 %v618, %v615
    %v742 = vpack.c.b16 %v619, %v616
    %v743 = vpack.c.b16 %v623, %v620
    %v744 = vpack.c.b16 %v624, %v621
    %v745 = vpack.c.b16 %v625, %v622
    %v746 = vpack.c.b16 %v629, %v626
    %v747 = vpack.c.b16 %v630, %v627
    %v748 = vpack.c.b16 %v631, %v628
    %v749 = vpack.c.b16 %v635, %v632
    %v750 = vpack.c.b16 %v636, %v633
    %v751 = vpack.c.b16 %v637, %v634
    %v752 = vpack.c.b16 %v641, %v638
    %v753 = vpack.c.b16 %v642, %v639
    %v754 = vpack.c.b16 %v643, %v640
    %v755 = vpack.c.b16 %v647, %v644
    %v756 = vpack.c.b16 %v648, %v645
    %v757 = vpack.c.b16 %v649, %v646
    %v758 = vpack.c.b16 %v653, %v650
    %v759 = vpack.c.b16 %v654, %v651
    %v760 = vpack.c.b16 %v655, %v652
    %v761 = vpack.c.b16 %v659, %v656
    %v762 = vpack.c.b16 %v660, %v657
    %v763 = vpack.c.b16 %v661, %v658
    %v764 = vpack.c.b16 %v665, %v662
    %v765 = vpack.c.b16 %v666, %v663
    %v766 = vpack.c.b16 %v667, %v664
    %v767 = vpack.c.b16 %v671, %v668
    %v768 = vpack.c.b16 %v672, %v669
    %v769 = vpack.c.b16 %v673, %v670
    %866 = vmatpush.bf16.msra.mxu0 %v695
    %867 = vmatpush.bf16.msra.mxu0 %v692
    %868 = vmatpush.bf16.msra.mxu0 %v689
    %869 = vmatpush.bf16.msra.mxu0 %v686
    %870 = vmatpush.bf16.msra.mxu0 %v683
    %871 = vmatpush.bf16.msra.mxu0 %v680
    %872 = vmatpush.bf16.msra.mxu0 %v677
    %873 = vmatpush.bf16.msra.mxu0 %v674
    %874 = vmatmul.bf16.gmra.mxu0 %v222
    %v875 = vpop.f32.mrf.mxu0
    %v876 = vadd.f32 0.0, %v875
    %v877 = vpop.f32.mrf.mxu0
    %878 = vdwg.mxu0
    %879 = vmatpush.bf16.msra.mxu0 %v719
    %880 = vmatpush.bf16.msra.mxu0 %v716
    %881 = vmatpush.bf16.msra.mxu0 %v713
    %882 = vmatpush.bf16.msra.mxu0 %v710
    %883 = vmatpush.bf16.msra.mxu0 %v707
    %884 = vmatpush.bf16.msra.mxu0 %v704
    %885 = vmatpush.bf16.msra.mxu0 %v701
    %886 = vmatpush.bf16.msra.mxu0 %v698
    %887 = vmatmul.bf16.gmra.mxu0 %v223
    %v888 = vpop.f32.mrf.mxu0
    %v889 = vadd.f32 %v876, %v888
    %v890 = vpop.f32.mrf.mxu0
    %891 = vdwg.mxu0
    %892 = vmatpush.bf16.msra.mxu0 %v743
    %893 = vmatpush.bf16.msra.mxu0 %v740
    %894 = vmatpush.bf16.msra.mxu0 %v737
    %895 = vmatpush.bf16.msra.mxu0 %v734
    %896 = vmatpush.bf16.msra.mxu0 %v731
    %897 = vmatpush.bf16.msra.mxu0 %v728
    %898 = vmatpush.bf16.msra.mxu0 %v725
    %899 = vmatpush.bf16.msra.mxu0 %v722
    %900 = vmatmul.bf16.gmra.mxu0 %v224
    %v901 = vpop.f32.mrf.mxu0
    %v902 = vadd.f32 %v889, %v901
    %v903 = vpop.f32.mrf.mxu0
    %904 = vdwg.mxu0
    %905 = vmatpush.bf16.msra.mxu0 %v767
    %906 = vmatpush.bf16.msra.mxu0 %v764
    %907 = vmatpush.bf16.msra.mxu0 %v761
    %908 = vmatpush.bf16.msra.mxu0 %v758
    %909 = vmatpush.bf16.msra.mxu0 %v755
    %910 = vmatpush.bf16.msra.mxu0 %v752
    %911 = vmatpush.bf16.msra.mxu0 %v749
    %912 = vmatpush.bf16.msra.mxu0 %v746
    %913 = vmatmul.bf16.gmra.mxu0 %v225
    %v914 = vpop.f32.mrf.mxu0
    %v915 = vadd.f32 %v902, %v914
    %v916 = vpop.f32.mrf.mxu0
    %917 = vdwg.mxu0
    %918 = vmatpush.bf16.msra.mxu0 %v696
    %919 = vmatpush.bf16.msra.mxu0 %v693
    %920 = vmatpush.bf16.msra.mxu0 %v690
    %921 = vmatpush.bf16.msra.mxu0 %v687
    %922 = vmatpush.bf16.msra.mxu0 %v684
    %923 = vmatpush.bf16.msra.mxu0 %v681
    %924 = vmatpush.bf16.msra.mxu0 %v678
    %925 = vmatpush.bf16.msra.mxu0 %v675
    %926 = vmatmul.bf16.gmra.mxu0 %v222
    %v927 = vpop.f32.mrf.mxu0
    %v928 = vadd.f32 0.0, %v927
    %v929 = vpop.f32.mrf.mxu0
    %930 = vdwg.mxu0
    %931 = vmatpush.bf16.msra.mxu0 %v720
    %932 = vmatpush.bf16.msra.mxu0 %v717
    %933 = vmatpush.bf16.msra.mxu0 %v714
    %934 = vmatpush.bf16.msra.mxu0 %v711
    %935 = vmatpush.bf16.msra.mxu0 %v708
    %936 = vmatpush.bf16.msra.mxu0 %v705
    %937 = vmatpush.bf16.msra.mxu0 %v702
    %938 = vmatpush.bf16.msra.mxu0 %v699
    %939 = vmatmul.bf16.gmra.mxu0 %v223
    %v940 = vpop.f32.mrf.mxu0
    %v941 = vadd.f32 %v928, %v940
    %v942 = vpop.f32.mrf.mxu0
    %943 = vdwg.mxu0
    %944 = vmatpush.bf16.msra.mxu0 %v744
    %945 = vmatpush.bf16.msra.mxu0 %v741
    %946 = vmatpush.bf16.msra.mxu0 %v738
    %947 = vmatpush.bf16.msra.mxu0 %v735
    %948 = vmatpush.bf16.msra.mxu0 %v732
    %949 = vmatpush.bf16.msra.mxu0 %v729
    %950 = vmatpush.bf16.msra.mxu0 %v726
    %951 = vmatpush.bf16.msra.mxu0 %v723
    %952 = vmatmul.bf16.gmra.mxu0 %v224
    %v953 = vpop.f32.mrf.mxu0
    %v954 = vadd.f32 %v941, %v953
    %v955 = vpop.f32.mrf.mxu0
    %956 = vdwg.mxu0
    %957 = vmatpush.bf16.msra.mxu0 %v768
    %958 = vmatpush.bf16.msra.mxu0 %v765
    %959 = vmatpush.bf16.msra.mxu0 %v762
    %960 = vmatpush.bf16.msra.mxu0 %v759
    %961 = vmatpush.bf16.msra.mxu0 %v756
    %962 = vmatpush.bf16.msra.mxu0 %v753
    %963 = vmatpush.bf16.msra.mxu0 %v750
    %964 = vmatpush.bf16.msra.mxu0 %v747
    %965 = vmatmul.bf16.gmra.mxu0 %v225
    %v966 = vpop.f32.mrf.mxu0
    %v967 = vadd.f32 %v954, %v966
    %v968 = vpop.f32.mrf.mxu0
    %969 = vdwg.mxu0
    %970 = vmatpush.bf16.msra.mxu0 %v697
    %971 = vmatpush.bf16.msra.mxu0 %v694
    %972 = vmatpush.bf16.msra.mxu0 %v691
    %973 = vmatpush.bf16.msra.mxu0 %v688
    %974 = vmatpush.bf16.msra.mxu0 %v685
    %975 = vmatpush.bf16.msra.mxu0 %v682
    %976 = vmatpush.bf16.msra.mxu0 %v679
    %977 = vmatpush.bf16.msra.mxu0 %v676
    %978 = vmatmul.bf16.gmra.mxu0 %v222
    %v979 = vpop.f32.mrf.mxu0
    %v980 = vadd.f32 0.0, %v979
    %v981 = vpop.f32.mrf.mxu0
    %982 = vdwg.mxu0
    %983 = vmatpush.bf16.msra.mxu0 %v721
    %984 = vmatpush.bf16.msra.mxu0 %v718
    %985 = vmatpush.bf16.msra.mxu0 %v715
    %986 = vmatpush.bf16.msra.mxu0 %v712
    %987 = vmatpush.bf16.msra.mxu0 %v709
    %988 = vmatpush.bf16.msra.mxu0 %v706
    %989 = vmatpush.bf16.msra.mxu0 %v703
    %990 = vmatpush.bf16.msra.mxu0 %v700
    %991 = vmatmul.bf16.gmra.mxu0 %v223
    %v992 = vpop.f32.mrf.mxu0
    %v993 = vadd.f32 %v980, %v992
    %v994 = vpop.f32.mrf.mxu0
    %995 = vdwg.mxu0
    %996 = vmatpush.bf16.msra.mxu0 %v745
    %997 = vmatpush.bf16.msra.mxu0 %v742
    %998 = vmatpush.bf16.msra.mxu0 %v739
    %999 = vmatpush.bf16.msra.mxu0 %v736
    %1000 = vmatpush.bf16.msra.mxu0 %v733
    %1001 = vmatpush.bf16.msra.mxu0 %v730
    %1002 = vmatpush.bf16.msra.mxu0 %v727
    %1003 = vmatpush.bf16.msra.mxu0 %v724
    %1004 = vmatmul.bf16.gmra.mxu0 %v224
    %v1005 = vpop.f32.mrf.mxu0
    %v1006 = vadd.f32 %v993, %v1005
    %v1007 = vpop.f32.mrf.mxu0
    %1008 = vdwg.mxu0
    %1009 = vmatpush.bf16.msra.mxu0 %v769
    %1010 = vmatpush.bf16.msra.mxu0 %v766
    %1011 = vmatpush.bf16.msra.mxu0 %v763
    %1012 = vmatpush.bf16.msra.mxu0 %v760
    %1013 = vmatpush.bf16.msra.mxu0 %v757
    %1014 = vmatpush.bf16.msra.mxu0 %v754
    %1015 = vmatpush.bf16.msra.mxu0 %v751
    %1016 = vmatpush.bf16.msra.mxu0 %v748
    %1017 = vmatmul.bf16.gmra.mxu0 %v225
    %v1018 = vpop.f32.mrf.mxu0
    %v1019 = vadd.f32 %v1006, %v1018
    %v1020 = vpop.f32.mrf.mxu0
    %1021 = vdwg.mxu0
    %v1022 = vld [vmem:[%s4] sm:$0x7]
    %v1023 = vpack.c.bf16 %v967, %v915
    %v1024 = vpack.c.bf16 %v1019, %v1019
    %1026 = vst [vmem:[#allocation1] ss:$9 sm:$0xff] %v1022
    %v1027 = vld [vmem:[#allocation1] sm:$0xff]
    %v1028 = vld [vmem:[#allocation1 + $0x9] sm:$0xff]
    %v1029 = vld [vmem:[#allocation1 + $0x12] sm:$0xff]
    %v1030 = vpack.i.b16 %v1027, %v1027
    %v1032 = vperm.slane %v1030, 0
    %v1033 = vpack.i.b16 %v1028, %v1028
    %v1035 = vperm.slane %v1033, 0
    %v1036 = vpack.i.b16 %v1029, %v1029
    %v1038 = vperm.slane %v1036, 0
    %v1039 = vunpack.c.l.bf16 %v1023
    %v1040 = vunpack.c.h.bf16 %v1023
    %v1041 = vunpack.c.l.bf16 %v1024
    %v1042 = vunpack.c.l.bf16 %v1032
    %v1043 = vunpack.c.l.bf16 %v1035
    %v1044 = vunpack.c.l.bf16 %v1038
    %v1045 = vadd.f32 %v1039, %v1042
    %v1046 = vadd.f32 %v1040, %v1043
    %v1047 = vadd.f32 %v1041, %v1044
    %v1048 = vpack.c.bf16 %v1046, %v1045
    %v1049 = vpack.c.bf16 %v1047, %v1047
    %v1050 = vunpack.c.l.bf16 %v1048
    %v1051 = vunpack.c.h.bf16 %v1048
    %v1052 = vunpack.c.l.bf16 %v1049
    %v1053 = vmax.f32 %v1050, 0.0
    %v1054 = vmax.f32 %v1051, 0.0
    %v1055 = vmax.f32 %v1052, 0.0
    %v1056 = vpack.c.bf16 %v1054, %v1053
    %v1057 = vpack.c.bf16 %v1055, %v1055
    %v1058 = vld [vmem:[%s5] sm:$0x7]
    %v1059 = vunpack.c.l.bf16 %v1056
    %v1060 = vunpack.c.h.bf16 %v1056
    %v1061 = vunpack.c.l.bf16 %v1057
    %v1063 = vperm.slane %v1058, 0
    %v1064 = vperm.slane %v1058, 1
    %v1065 = vperm.slane %v1058, 2
    %v1069 = vmul.f32 %v1059, %v1063
    %v1070 = vmul.f32 %v1060, %v1064
    %v1071 = vmul.f32 %v1061, %v1065
    %vm1072 = vcmask 1041408
    %v1073 = vsel %vm1072, %v1069, 0.0
    %v1074 = vsel %vm1072, %v1070, 0.0
    %v1075 = vadd.f32 %v1073, %v1074
    %v1076 = vsel %vm1072, %v1071, 0.0
    %v1077 = vadd.f32 %v1075, %v1076
    %1078 = vadd.xlane.f32.xlu0 %v1077
    %v1079 = vpop.xlane.xlu0 %1078
    %s1080 = sld [smem:[#allocation2]]
    %v1081 = vstv %s1080
    %v1082 = vadd.f32 %v1079, %v1081
    %v1084 = vlaneseq
    %v1085 = vand.u32 %v1084, 127
    %v1086 = vperm.slane %v1082, %v1085
    %vm1088 = vcmask 8192
    %1089 = vst.msk [vmem:[#allocation11] sm:$0x1] %vm1088, %v1086
    // Predicated region
    $region46: #{tpu_custom_call.1} parent=1 // pred_check
      _
    $region47: #{tpu_custom_call.1} parent=1 // pred_check_branch
      %1091 = sbr.rel (0) target = $region49
    $region48: #{tpu_custom_call.1} parent=1 // pred_region
      %1093 = vsyncadd [#allocation5], 0
      %s1095 = sshll.u32 [#allocation11], 4
      %s1096 = int_to_ptr.vmem [resolvable:$true] %s1095
      %s1097 = sshll.u32 %s7, 4
      %s1098 = int_to_ptr.hbm [resolvable:$true] %s1097
      %1100 = dma.vmem_to_hbm [thread:$0]  %s1096, 16, %s1098, [#allocation5]
    $region49: #{tpu_custom_call.1} parent=1 // pred_fallthru
      _
    // Predicated region
    $region50: #{tpu_custom_call.1} parent=1 // pred_check
      _
    $region51: #{tpu_custom_call.1} parent=1 // pred_check_branch
      %1102 = sbr.rel (0) target = $region53
    $region52: #{tpu_custom_call.1} parent=1 // pred_region
      %1104 = dma.done [#allocation5], 16
    $region53: #{tpu_custom_call.1} parent=1 // pred_fallthru
      _
    %1105 = vsyncpa [#allocation4], 1
    %1106 = vsyncpa [#allocation7], 1
    %1107 = vsyncpa [#allocation10], 1
    %1108 = vsyncpa [#allocation5], 1

</llo_original>
